<compile_context>
chip_gen: v5e
topology: v5e:2x2
jax: 0.10.0
libtpu: 0.0.40
codegen_flags: <defaults>
</compile_context>

<pallas_src>
import jax
import jax.numpy as jnp
from jax.experimental import pallas as pl
from jax.experimental.pallas import tpu as pltpu


LEAKY_SLOPE = 0.15
LANE = 128  # TPU lane width; last-layer fan_out (2) is MXU-padded up to this.


def _leaky(x, slope=LEAKY_SLOPE):
    return jnp.where(x > 0, x, slope * x)


def _round_up(n, m):
    return ((n + m - 1) // m) * m


def encoder_kernel(x_ref,
                   w1_ref, b1_ref,
                   w2_ref, b2_ref,
                   w3_ref, b3_ref,
                   w4_ref, b4_ref,
                   z_ref):
    """One batch tile of the Encoder forward.

    x_ref : (TILE_B, in_size)      compute dtype (bf16 by default)
    w*_ref: (fan_in, fan_out)      compute dtype, resident in VMEM across grid
    b*_ref: (1, fan_out)           f32
    w4/b4 : lane-padded to 128 columns (zero pad) for a full-lane MXU result
    z_ref : (TILE_B, out_dim)      f32 — only the real output columns are stored
    """
    cdt = w1_ref.dtype  # matmul operand dtype (bf16 or f32)

    # lin1 -> LeakyReLU  (dropout1 identity in eval mode)
    h = jnp.dot(x_ref[...], w1_ref[...], preferred_element_type=jnp.float32)
    h = _leaky(h + b1_ref[...])

    # lin2 -> LeakyReLU  (dropout2 identity)
    h = jnp.dot(h.astype(cdt), w2_ref[...], preferred_element_type=jnp.float32)
    h = _leaky(h + b2_ref[...])

    # lin3 -> LeakyReLU  (dropout3 identity)
    h = jnp.dot(h.astype(cdt), w3_ref[...], preferred_element_type=jnp.float32)
    h = _leaky(h + b3_ref[...])

    # lin4 -> LeakyReLU.  w4/b4 are zero-padded to 128 lanes so the matmul fills
    # the MXU result lanes; only the real out_dim columns are written to HBM
    # (leaky(0+0)=0 in the padded lanes, so the slice is exact).
    z = jnp.dot(h.astype(cdt), w4_ref[...], preferred_element_type=jnp.float32)
    z = _leaky(z + b4_ref[...])
    z_ref[...] = z[:, : z_ref.shape[1]]


def prepare_encoder_params(params, compute_dtype=jnp.bfloat16):
    """One-time (hoisted) weight cast + lane-pad of the tiny last layer."""
    w1, b1, w2, b2, w3, b3, w4, b4 = params
    out_dim = w4.shape[1]
    w4p = jnp.pad(w4, ((0, 0), (0, LANE - out_dim)))
    b4p = jnp.pad(b4, ((0, 0), (0, LANE - out_dim)))
    ws = tuple(w.astype(compute_dtype) for w in (w1, w2, w3, w4p))
    bs = tuple(b.astype(jnp.float32) for b in (b1, b2, b3, b4p))
    return ws, bs, out_dim


def encoder_forward(x, prepared, *, tile_b=512):
    """x: (batch, in_size) f32.  Returns encoder output z: (batch, 2) f32."""
    (w1c, w2c, w3c, w4c), (b1f, b2f, b3f, b4f), out_dim = prepared
    batch, in_size = x.shape
    cdt = w1c.dtype

    # Effective batch tile: sublane-aligned, no bigger than the (padded) batch,
    # and split into >= 2 grid steps when the batch allows so the "parallel"
    # grid axis can shard across both v7x TensorCores.
    tile = min(tile_b, _round_up(batch, 16))
    if batch > 32 and pl.cdiv(batch, tile) < 2:
        tile = max(16, _round_up(pl.cdiv(batch, 2), 16))
    n_tiles = pl.cdiv(batch, tile)
    padded_batch = n_tiles * tile

    # Only pad the ragged tail (skip the extra HBM pass when already aligned).
    xp = x if padded_batch == batch else jnp.pad(
        x, ((0, padded_batch - batch), (0, 0)))
    xc = xp.astype(cdt)

    def resident(arr):
        # Full-array block with a constant index_map: fetched once, stays in VMEM.
        return pl.BlockSpec(arr.shape, lambda i: (0, 0))

    z_pad = pl.pallas_call(
        encoder_kernel,
        out_shape=jax.ShapeDtypeStruct((padded_batch, out_dim), jnp.float32),
        grid=(n_tiles,),
        in_specs=[
            pl.BlockSpec((tile, in_size), lambda i: (i, 0)),   # x tiles
            resident(w1c), resident(b1f),
            resident(w2c), resident(b2f),
            resident(w3c), resident(b3f),
            resident(w4c), resident(b4f),
        ],
        # Last block dim == full array dim (out_dim), so the (8,128) rule is
        # satisfied; output DMA is a contiguous 8 B/row stream.
        out_specs=pl.BlockSpec((tile, out_dim), lambda i: (i, 0)),
        compiler_params=pltpu.CompilerParams(
            dimension_semantics=("parallel",)),   # megacore-shard batch on v7x
    )(xc, w1c, b1f, w2c, b2f, w3c, b3f, w4c, b4f)

    return z_pad if padded_batch == batch else z_pad[:batch]


def _init_linear(key, fan_in, fan_out):
    """Deterministic init mimicking torch.nn.Linear (uniform +-1/sqrt(fan_in)).

    Weight is stored (fan_in, fan_out) (transposed vs. PyTorch) so the kernel
    does x @ W with no in-kernel transpose; bias is (1, fan_out).
    """
    kw, kb = jax.random.split(key)
    bound = 1.0 / jnp.sqrt(jnp.float32(fan_in))
    w = jax.random.uniform(kw, (fan_in, fan_out), jnp.float32, -bound, bound)
    b = jax.random.uniform(kb, (1, fan_out), jnp.float32, -bound, bound)
    return w, b


if __name__ == "__main__":
    # Shapes consistent with Encoder(in_size=32) defaults.
    batch = 8
    in_size = 32
    h1, h2, h3 = 256, 128, 32
    out_dim = 2

    root = jax.random.PRNGKey(0)
    kx, k1, k2, k3, k4 = jax.random.split(root, 5)

    x = jax.random.normal(kx, (batch, in_size), jnp.float32)

    w1, b1 = _init_linear(k1, in_size, h1)
    w2, b2 = _init_linear(k2, h1, h2)
    w3, b3 = _init_linear(k3, h2, h3)
    w4, b4 = _init_linear(k4, h3, out_dim)
    params = (w1, b1, w2, b2, w3, b3, w4, b4)

    prepared = prepare_encoder_params(params)   # hoisted cast/pad (done once)
    z = encoder_forward(x, prepared)
    jax.block_until_ready(z)

    # Pure-JAX reference with the same bf16 matmul operands / f32 accumulation.
    def ref(xv, cdt=jnp.bfloat16):
        a = lambda t: jnp.where(t > 0, t, LEAKY_SLOPE * t)
        hh = a(jnp.dot(xv.astype(cdt), w1.astype(cdt),
                       preferred_element_type=jnp.float32) + b1)
        hh = a(jnp.dot(hh.astype(cdt), w2.astype(cdt),
                       preferred_element_type=jnp.float32) + b2)
        hh = a(jnp.dot(hh.astype(cdt), w3.astype(cdt),
                       preferred_element_type=jnp.float32) + b3)
        return a(jnp.dot(hh.astype(cdt), w4.astype(cdt),
                         preferred_element_type=jnp.float32) + b4)

    ref_z = ref(x)
    assert z.shape == (batch, out_dim)
    assert jnp.allclose(z, ref_z, atol=1e-2, rtol=1e-2), (
        "max abs err", float(jnp.max(jnp.abs(z - ref_z))))

    # Also exercise a multi-tile / ragged-batch path (tile split for megacore).
    big_batch = 1000
    xb = jax.random.normal(jax.random.PRNGKey(1), (big_batch, in_size), jnp.float32)
    zb = encoder_forward(xb, prepared, tile_b=512)
    jax.block_until_ready(zb)
    assert zb.shape == (big_batch, out_dim)
    assert jnp.allclose(zb, ref(xb), atol=1e-2, rtol=1e-2), (
        "max abs err (big)", float(jnp.max(jnp.abs(zb - ref(xb)))))

    print("KERNEL_OK")
</pallas_src>

<mosaic_0001>
module attributes {stable_mosaic.version = 11 : i64} {
  func.func @encoder_kernel(%arg0: i32, %arg1: memref<16x32xbf16, #tpu.memory_space<vmem>>, %arg2: memref<32x256xbf16, #tpu.memory_space<vmem>>, %arg3: memref<1x256xf32, #tpu.memory_space<vmem>>, %arg4: memref<256x128xbf16, #tpu.memory_space<vmem>>, %arg5: memref<1x128xf32, #tpu.memory_space<vmem>>, %arg6: memref<128x32xbf16, #tpu.memory_space<vmem>>, %arg7: memref<1x32xf32, #tpu.memory_space<vmem>>, %arg8: memref<32x128xbf16, #tpu.memory_space<vmem>>, %arg9: memref<1x128xf32, #tpu.memory_space<vmem>>, %arg10: memref<16x2xf32, #tpu.memory_space<vmem>>) attributes {dimension_semantics = [#tpu.dimension_semantics<parallel>], iteration_bounds = array<i64: 1>, scalar_prefetch = 0 : i64, scratch_operands = 0 : i64, tpu.core_type = #tpu.core_type<tc>, window_params = [{transform_indices = @transform_0, window_bounds = array<i64: 16, 32>}, {pipeline_mode = #tpu.pipeline_mode<synchronous>, transform_indices = @transform_1, window_bounds = array<i64: 32, 256>}, {pipeline_mode = #tpu.pipeline_mode<synchronous>, transform_indices = @transform_2, window_bounds = array<i64: 1, 256>}, {pipeline_mode = #tpu.pipeline_mode<synchronous>, transform_indices = @transform_3, window_bounds = array<i64: 256, 128>}, {pipeline_mode = #tpu.pipeline_mode<synchronous>, transform_indices = @transform_4, window_bounds = array<i64: 1, 128>}, {pipeline_mode = #tpu.pipeline_mode<synchronous>, transform_indices = @transform_5, window_bounds = array<i64: 128, 32>}, {pipeline_mode = #tpu.pipeline_mode<synchronous>, transform_indices = @transform_6, window_bounds = array<i64: 1, 32>}, {pipeline_mode = #tpu.pipeline_mode<synchronous>, transform_indices = @transform_7, window_bounds = array<i64: 32, 128>}, {pipeline_mode = #tpu.pipeline_mode<synchronous>, transform_indices = @transform_8, window_bounds = array<i64: 1, 128>}, {transform_indices = @transform_9, window_bounds = array<i64: 16, 2>}]} {
    %c0 = arith.constant 0 : index
    %c0_0 = arith.constant 0 : index
    %0 = vector.load %arg1[%c0, %c0_0] : memref<16x32xbf16, #tpu.memory_space<vmem>>, vector<16x32xbf16>
    %c0_1 = arith.constant 0 : index
    %c0_2 = arith.constant 0 : index
    %1 = vector.load %arg2[%c0_1, %c0_2] : memref<32x256xbf16, #tpu.memory_space<vmem>>, vector<32x256xbf16>
    %cst = arith.constant dense<0.000000e+00> : vector<16x256xf32>
    %2 = tpu.matmul %0, %1, %cst {dimension_numbers = #tpu.dot_dimension_numbers<[1], [0], [0], [1], [0, 0, 1, 1], [], []>} : vector<16x32xbf16>, vector<32x256xbf16>, vector<16x256xf32> -> vector<16x256xf32>
    %c0_3 = arith.constant 0 : index
    %c0_4 = arith.constant 0 : index
    %3 = vector.load %arg3[%c0_3, %c0_4] : memref<1x256xf32, #tpu.memory_space<vmem>>, vector<1x256xf32>
    %4 = vector.broadcast %3 : vector<1x256xf32> to vector<16x256xf32>
    %5 = arith.addf %2, %4 : vector<16x256xf32>
    %cst_5 = arith.constant 0.000000e+00 : f32
    %6 = vector.broadcast %cst_5 : f32 to vector<16x256xf32>
    %7 = arith.cmpf ogt, %5, %6 : vector<16x256xf32>
    %cst_6 = arith.constant 1.500000e-01 : f32
    %8 = vector.broadcast %cst_6 : f32 to vector<16x256xf32>
    %9 = arith.mulf %8, %5 : vector<16x256xf32>
    %10 = arith.select %7, %5, %9 : vector<16x256xi1>, vector<16x256xf32>
    %11 = arith.truncf %10 : vector<16x256xf32> to vector<16x256xbf16>
    %c0_7 = arith.constant 0 : index
    %c0_8 = arith.constant 0 : index
    %12 = vector.load %arg4[%c0_7, %c0_8] : memref<256x128xbf16, #tpu.memory_space<vmem>>, vector<256x128xbf16>
    %cst_9 = arith.constant dense<0.000000e+00> : vector<16x128xf32>
    %13 = tpu.matmul %11, %12, %cst_9 {dimension_numbers = #tpu.dot_dimension_numbers<[1], [0], [0], [1], [0, 0, 1, 1], [], []>} : vector<16x256xbf16>, vector<256x128xbf16>, vector<16x128xf32> -> vector<16x128xf32>
    %c0_10 = arith.constant 0 : index
    %c0_11 = arith.constant 0 : index
    %14 = vector.load %arg5[%c0_10, %c0_11] : memref<1x128xf32, #tpu.memory_space<vmem>>, vector<1x128xf32>
    %15 = vector.broadcast %14 : vector<1x128xf32> to vector<16x128xf32>
    %16 = arith.addf %13, %15 : vector<16x128xf32>
    %cst_12 = arith.constant 0.000000e+00 : f32
    %17 = vector.broadcast %cst_12 : f32 to vector<16x128xf32>
    %18 = arith.cmpf ogt, %16, %17 : vector<16x128xf32>
    %cst_13 = arith.constant 1.500000e-01 : f32
    %19 = vector.broadcast %cst_13 : f32 to vector<16x128xf32>
    %20 = arith.mulf %19, %16 : vector<16x128xf32>
    %21 = arith.select %18, %16, %20 : vector<16x128xi1>, vector<16x128xf32>
    %22 = arith.truncf %21 : vector<16x128xf32> to vector<16x128xbf16>
    %c0_14 = arith.constant 0 : index
    %c0_15 = arith.constant 0 : index
    %23 = vector.load %arg6[%c0_14, %c0_15] : memref<128x32xbf16, #tpu.memory_space<vmem>>, vector<128x32xbf16>
    %cst_16 = arith.constant dense<0.000000e+00> : vector<16x32xf32>
    %24 = tpu.matmul %22, %23, %cst_16 {dimension_numbers = #tpu.dot_dimension_numbers<[1], [0], [0], [1], [0, 0, 1, 1], [], []>} : vector<16x128xbf16>, vector<128x32xbf16>, vector<16x32xf32> -> vector<16x32xf32>
    %c0_17 = arith.constant 0 : index
    %c0_18 = arith.constant 0 : index
    %25 = vector.load %arg7[%c0_17, %c0_18] : memref<1x32xf32, #tpu.memory_space<vmem>>, vector<1x32xf32>
    %26 = vector.broadcast %25 : vector<1x32xf32> to vector<16x32xf32>
    %27 = arith.addf %24, %26 : vector<16x32xf32>
    %cst_19 = arith.constant 0.000000e+00 : f32
    %28 = vector.broadcast %cst_19 : f32 to vector<16x32xf32>
    %29 = arith.cmpf ogt, %27, %28 : vector<16x32xf32>
    %cst_20 = arith.constant 1.500000e-01 : f32
    %30 = vector.broadcast %cst_20 : f32 to vector<16x32xf32>
    %31 = arith.mulf %30, %27 : vector<16x32xf32>
    %32 = arith.select %29, %27, %31 : vector<16x32xi1>, vector<16x32xf32>
    %33 = arith.truncf %32 : vector<16x32xf32> to vector<16x32xbf16>
    %c0_21 = arith.constant 0 : index
    %c0_22 = arith.constant 0 : index
    %34 = vector.load %arg8[%c0_21, %c0_22] : memref<32x128xbf16, #tpu.memory_space<vmem>>, vector<32x128xbf16>
    %cst_23 = arith.constant dense<0.000000e+00> : vector<16x128xf32>
    %35 = tpu.matmul %33, %34, %cst_23 {dimension_numbers = #tpu.dot_dimension_numbers<[1], [0], [0], [1], [0, 0, 1, 1], [], []>} : vector<16x32xbf16>, vector<32x128xbf16>, vector<16x128xf32> -> vector<16x128xf32>
    %c0_24 = arith.constant 0 : index
    %c0_25 = arith.constant 0 : index
    %36 = vector.load %arg9[%c0_24, %c0_25] : memref<1x128xf32, #tpu.memory_space<vmem>>, vector<1x128xf32>
    %37 = vector.broadcast %36 : vector<1x128xf32> to vector<16x128xf32>
    %38 = arith.addf %35, %37 : vector<16x128xf32>
    %cst_26 = arith.constant 0.000000e+00 : f32
    %39 = vector.broadcast %cst_26 : f32 to vector<16x128xf32>
    %40 = arith.cmpf ogt, %38, %39 : vector<16x128xf32>
    %cst_27 = arith.constant 1.500000e-01 : f32
    %41 = vector.broadcast %cst_27 : f32 to vector<16x128xf32>
    %42 = arith.mulf %41, %38 : vector<16x128xf32>
    %43 = arith.select %40, %38, %42 : vector<16x128xi1>, vector<16x128xf32>
    %44 = vector.extract_strided_slice %43 {offsets = [0, 0], sizes = [16, 2], strides = [1, 1]} : vector<16x128xf32> to vector<16x2xf32>
    %c0_28 = arith.constant 0 : index
    %c0_29 = arith.constant 0 : index
    %45 = vector.load %arg10[%c0_28, %c0_29] : memref<16x2xf32, #tpu.memory_space<vmem>>, vector<16x2xf32>
    tpu.vector_store %arg10[%c0_28, %c0_29], %44 {strides = array<i32>} : memref<16x2xf32, #tpu.memory_space<vmem>>, vector<16x2xf32>,
    return
  }
  func.func @transform_0(%arg0: i32) -> (i32, i32) {
    %c0_i32 = arith.constant 0 : i32
    %c0_i32_0 = arith.constant 0 : i32
    return %arg0, %c0_i32 : i32, i32
  }
  func.func @transform_1(%arg0: i32) -> (i32, i32) {
    %c0_i32 = arith.constant 0 : i32
    %c0_i32_0 = arith.constant 0 : i32
    %c0_i32_1 = arith.constant 0 : i32
    return %c0_i32, %c0_i32_0 : i32, i32
  }
  func.func @transform_2(%arg0: i32) -> (i32, i32) {
    %c0_i32 = arith.constant 0 : i32
    %c0_i32_0 = arith.constant 0 : i32
    %c0_i32_1 = arith.constant 0 : i32
    return %c0_i32, %c0_i32_0 : i32, i32
  }
  func.func @transform_3(%arg0: i32) -> (i32, i32) {
    %c0_i32 = arith.constant 0 : i32
    %c0_i32_0 = arith.constant 0 : i32
    %c0_i32_1 = arith.constant 0 : i32
    return %c0_i32, %c0_i32_0 : i32, i32
  }
  func.func @transform_4(%arg0: i32) -> (i32, i32) {
    %c0_i32 = arith.constant 0 : i32
    %c0_i32_0 = arith.constant 0 : i32
    %c0_i32_1 = arith.constant 0 : i32
    return %c0_i32, %c0_i32_0 : i32, i32
  }
  func.func @transform_5(%arg0: i32) -> (i32, i32) {
    %c0_i32 = arith.constant 0 : i32
    %c0_i32_0 = arith.constant 0 : i32
    %c0_i32_1 = arith.constant 0 : i32
    return %c0_i32, %c0_i32_0 : i32, i32
  }
  func.func @transform_6(%arg0: i32) -> (i32, i32) {
    %c0_i32 = arith.constant 0 : i32
    %c0_i32_0 = arith.constant 0 : i32
    %c0_i32_1 = arith.constant 0 : i32
    return %c0_i32, %c0_i32_0 : i32, i32
  }
  func.func @transform_7(%arg0: i32) -> (i32, i32) {
    %c0_i32 = arith.constant 0 : i32
    %c0_i32_0 = arith.constant 0 : i32
    %c0_i32_1 = arith.constant 0 : i32
    return %c0_i32, %c0_i32_0 : i32, i32
  }
  func.func @transform_8(%arg0: i32) -> (i32, i32) {
    %c0_i32 = arith.constant 0 : i32
    %c0_i32_0 = arith.constant 0 : i32
    %c0_i32_1 = arith.constant 0 : i32
    return %c0_i32, %c0_i32_0 : i32, i32
  }
  func.func @transform_9(%arg0: i32) -> (i32, i32) {
    %c0_i32 = arith.constant 0 : i32
    %c0_i32_0 = arith.constant 0 : i32
    return %arg0, %c0_i32 : i32, i32
  }
}

</mosaic_0001>

<llo_original>
// kernel: tpu_custom_call.1
$region0: #{tpu_custom_call.1}
  #allocation0 [shape = 'u32[]', space=smem, size = 0x4, offset = 0x4, fixed_abs, tag = 'smem constant byte address 0x4 - core index']
  #allocation1 [shape = 'u32[72,128]{1,0:T(1,128)}', space=vmem, size = 0x9000, scoped, tag = 'internal scratch']
  %s0 = inlined_call_operand.vmem [shape: bf16[16,32], index: 0, kind: input, shape index: {}]
  %s1 = inlined_call_operand.vmem [shape: bf16[32,256], index: 1, kind: input, shape index: {}]
  %s2 = inlined_call_operand.vmem [shape: f32[1,256], index: 2, kind: input, shape index: {}]
  %s3 = inlined_call_operand.hbm [shape: bf16[256,128], index: 3, kind: input, shape index: {}]
  %s4 = inlined_call_operand.vmem [shape: f32[1,128], index: 4, kind: input, shape index: {}]
  %s5 = inlined_call_operand.vmem [shape: bf16[128,32], index: 5, kind: input, shape index: {}]
  %s6 = inlined_call_operand.vmem [shape: f32[1,32], index: 6, kind: input, shape index: {}]
  %s7 = inlined_call_operand.vmem [shape: bf16[32,128], index: 7, kind: input, shape index: {}]
  %s8 = inlined_call_operand.vmem [shape: f32[1,128], index: 8, kind: input, shape index: {}]
  %s9 = inlined_call_operand.vmem [shape: f32[16,2], index: 9, kind: output, shape index: {}]
  %s10 = sld [smem:[#allocation0]]
  $region50: #{tpu_custom_call.1} parent=0
    _
  %s12 = ssub.s32 1, %s10
  %s13 = scalar_select 0, %s12, %s10
  $region1: #{tpu_custom_call.1} parent=0
    #allocation2 [shape = 'u8[65536]{0}', space=vmem, size = 0x10000, scoped, tag = 'input window, operand 3, single buffered']
    #allocation3 [shape = 's32[1]{0}', space=sflag, size = 0x4, scoped, tag = 'scoped memory for tpu_custom_call.1']
    %14 = vsyncpa [#allocation3], 0
    // Predicated region
    $region2: #{tpu_custom_call.1} parent=1 // pred_check
      _
    $region3: #{tpu_custom_call.1} parent=1 // pred_check_branch
      %16 = sbr.rel (0) target = $region5
    $region4: #{tpu_custom_call.1} parent=1 // pred_region
      _
    $region5: #{tpu_custom_call.1} parent=1 // pred_fallthru
      _
    // Predicated region
    $region6: #{tpu_custom_call.1} parent=1 // pred_check
      _
    $region7: #{tpu_custom_call.1} parent=1 // pred_check_branch
      %18 = sbr.rel (0) target = $region9
    $region8: #{tpu_custom_call.1} parent=1 // pred_region
      _
    $region9: #{tpu_custom_call.1} parent=1 // pred_fallthru
      _
    // Predicated region
    $region10: #{tpu_custom_call.1} parent=1 // pred_check
      _
    $region11: #{tpu_custom_call.1} parent=1 // pred_check_branch
      %20 = sbr.rel (0) target = $region13
    $region12: #{tpu_custom_call.1} parent=1 // pred_region
      _
    $region13: #{tpu_custom_call.1} parent=1 // pred_fallthru
      _
    // Predicated region
    $region14: #{tpu_custom_call.1} parent=1 // pred_check
      _
    $region15: #{tpu_custom_call.1} parent=1 // pred_check_branch
      %22 = sbr.rel (0) target = $region17
    $region16: #{tpu_custom_call.1} parent=1 // pred_region
      %24 = vsyncadd [#allocation3], 0
      %s25 = sshll.u32 %s3, 4
      %s26 = int_to_ptr.hbm [resolvable:$true] %s25
      %s27 = sshll.u32 [#allocation2], 4
      %s28 = int_to_ptr.vmem [resolvable:$true] %s27
      %33 = dma.hbm_to_vmem [thread:$0]  %s26, 2048, %s28, [#allocation3], 64, 64, 4
    $region17: #{tpu_custom_call.1} parent=1 // pred_fallthru
      _
    // Predicated region
    $region18: #{tpu_custom_call.1} parent=1 // pred_check
      _
    $region19: #{tpu_custom_call.1} parent=1 // pred_check_branch
      %35 = sbr.rel (0) target = $region21
    $region20: #{tpu_custom_call.1} parent=1 // pred_region
      _
    $region21: #{tpu_custom_call.1} parent=1 // pred_fallthru
      _
    // Predicated region
    $region22: #{tpu_custom_call.1} parent=1 // pred_check
      _
    $region23: #{tpu_custom_call.1} parent=1 // pred_check_branch
      %37 = sbr.rel (0) target = $region25
    $region24: #{tpu_custom_call.1} parent=1 // pred_region
      _
    $region25: #{tpu_custom_call.1} parent=1 // pred_fallthru
      _
    // Predicated region
    $region26: #{tpu_custom_call.1} parent=1 // pred_check
      _
    $region27: #{tpu_custom_call.1} parent=1 // pred_check_branch
      %39 = sbr.rel (0) target = $region29
    $region28: #{tpu_custom_call.1} parent=1 // pred_region
      _
    $region29: #{tpu_custom_call.1} parent=1 // pred_fallthru
      _
    // Predicated region
    $region30: #{tpu_custom_call.1} parent=1 // pred_check
      _
    $region31: #{tpu_custom_call.1} parent=1 // pred_check_branch
      %41 = sbr.rel (0) target = $region33
    $region32: #{tpu_custom_call.1} parent=1 // pred_region
      _
    $region33: #{tpu_custom_call.1} parent=1 // pred_fallthru
      _
    // Predicated region
    $region34: #{tpu_custom_call.1} parent=1 // pred_check
      _
    $region35: #{tpu_custom_call.1} parent=1 // pred_check_branch
      %43 = sbr.rel (0) target = $region37
    $region36: #{tpu_custom_call.1} parent=1 // pred_region
      _
    $region37: #{tpu_custom_call.1} parent=1 // pred_fallthru
      _
    // Predicated region
    $region38: #{tpu_custom_call.1} parent=1 // pred_check
      _
    $region39: #{tpu_custom_call.1} parent=1 // pred_check_branch
      %45 = sbr.rel (0) target = $region41
    $region40: #{tpu_custom_call.1} parent=1 // pred_region
      %47 = dma.done [#allocation3], 2048
    $region41: #{tpu_custom_call.1} parent=1 // pred_fallthru
      _
    %v49 = vld [vmem:[%s0] sm:$0xf]
    %v50 = vld [vmem:[%s0 + $0x4] sm:$0xf]
    %v51 = vld [vmem:[%s1] sm:$0xff]
    %v52 = vld [vmem:[%s1 + $0x8] sm:$0xff]
    %v53 = vld [vmem:[%s1 + $0x10] sm:$0xff]
    %v54 = vld [vmem:[%s1 + $0x18] sm:$0xff]
    %v55 = vld [vmem:[%s2] sm:$0x3]
    %v57 = vperm.slane %v55, 0
    %v58 = vperm.slane %v55, 1
    %v63 = vunpack.c.l.b16 %v49
    %v64 = vunpack.c.l.b16 %v50
    %v65 = vpack.c.b16 %v64, %v63
    %v70 = vunpack.c.l.b16 %v51
    %v71 = vunpack.c.h.b16 %v51
    %v72 = vunpack.c.l.b16 %v52
    %v73 = vunpack.c.h.b16 %v52
    %v74 = vunpack.c.l.b16 %v53
    %v75 = vunpack.c.h.b16 %v53
    %v76 = vunpack.c.l.b16 %v54
    %v77 = vunpack.c.h.b16 %v54
    %v78 = vpack.c.b16 %v72, %v70
    %v79 = vpack.c.b16 %v73, %v71
    %v80 = vpack.c.b16 %v76, %v74
    %v81 = vpack.c.b16 %v77, %v75
    %vm86 = vcmask 261120
    %v88 = vsel %vm86, %v65, 0
    %90 = vmatpush.bf16.msra.mxu0 0
    %91 = vmatpush.bf16.msra.mxu0 0
    %92 = vmatpush.bf16.msra.mxu0 0
    %93 = vmatpush.bf16.msra.mxu0 0
    %94 = vmatpush.bf16.msra.mxu0 0
    %95 = vmatpush.bf16.msra.mxu0 0
    %96 = vmatpush.bf16.msra.mxu0 %v80
    %97 = vmatpush.bf16.msra.mxu0 %v78
    %98 = vmatmul.bf16.gmra.mxu0 %v88
    %v99 = vpop.f32.mrf.mxu0
    %v100 = vadd.f32 %v57, %v99
    %v101 = vpop.f32.mrf.mxu0
    %v102 = vadd.f32 %v57, %v101
    %103 = vdwg.mxu0
    %104 = vmatpush.bf16.msra.mxu0 0
    %105 = vmatpush.bf16.msra.mxu0 0
    %106 = vmatpush.bf16.msra.mxu0 0
    %107 = vmatpush.bf16.msra.mxu0 0
    %108 = vmatpush.bf16.msra.mxu0 0
    %109 = vmatpush.bf16.msra.mxu0 0
    %110 = vmatpush.bf16.msra.mxu0 %v81
    %111 = vmatpush.bf16.msra.mxu0 %v79
    %112 = vmatmul.bf16.gmra.mxu0 %v88
    %v113 = vpop.f32.mrf.mxu0
    %v114 = vadd.f32 %v58, %v113
    %v115 = vpop.f32.mrf.mxu0
    %v116 = vadd.f32 %v58, %v115
    %117 = vdwg.mxu0
    %vm118 = vcmp.gt.f32.partialorder %v100, 0.0
    %vm119 = vcmp.gt.f32.partialorder %v114, 0.0
    %vm120 = vcmp.gt.f32.partialorder %v102, 0.0
    %vm121 = vcmp.gt.f32.partialorder %v116, 0.0
    %v122 = vmul.f32 %v100, 0.15
    %v123 = vmul.f32 %v114, 0.15
    %v124 = vmul.f32 %v102, 0.15
    %v125 = vmul.f32 %v116, 0.15
    %v126 = vsel %vm118, %v100, %v122
    %v127 = vsel %vm119, %v114, %v123
    %v128 = vsel %vm120, %v102, %v124
    %v129 = vsel %vm121, %v116, %v125
    %v130 = vpack.c.bf16 %v128, %v126
    %v131 = vpack.c.bf16 %v129, %v127
    %v132 = vld [vmem:[#allocation2] sm:$0xf]
    %v133 = vld [vmem:[#allocation2 + $0x4] sm:$0xf]
    %v134 = vld [vmem:[#allocation2 + $0x8] sm:$0xf]
    %v135 = vld [vmem:[#allocation2 + $0xc] sm:$0xf]
    %v136 = vld [vmem:[#allocation2 + $0x10] sm:$0xf]
    %v137 = vld [vmem:[#allocation2 + $0x14] sm:$0xf]
    %v138 = vld [vmem:[#allocation2 + $0x18] sm:$0xf]
    %v139 = vld [vmem:[#allocation2 + $0x1c] sm:$0xf]
    %v140 = vld [vmem:[#allocation2 + $0x20] sm:$0xf]
    %v141 = vld [vmem:[#allocation2 + $0x24] sm:$0xf]
    %v142 = vld [vmem:[#allocation2 + $0x28] sm:$0xf]
    %v143 = vld [vmem:[#allocation2 + $0x2c] sm:$0xf]
    %v144 = vld [vmem:[#allocation2 + $0x30] sm:$0xf]
    %v145 = vld [vmem:[#allocation2 + $0x34] sm:$0xf]
    %v146 = vld [vmem:[#allocation2 + $0x38] sm:$0xf]
    %v147 = vld [vmem:[#allocation2 + $0x3c] sm:$0xf]
    %v148 = vld [vmem:[#allocation2 + $0x40] sm:$0xf]
    %v149 = vld [vmem:[#allocation2 + $0x44] sm:$0xf]
    %v150 = vld [vmem:[#allocation2 + $0x48] sm:$0xf]
    %v151 = vld [vmem:[#allocation2 + $0x4c] sm:$0xf]
    %v152 = vld [vmem:[#allocation2 + $0x50] sm:$0xf]
    %v153 = vld [vmem:[#allocation2 + $0x54] sm:$0xf]
    %v154 = vld [vmem:[#allocation2 + $0x58] sm:$0xf]
    %v155 = vld [vmem:[#allocation2 + $0x5c] sm:$0xf]
    %v156 = vld [vmem:[#allocation2 + $0x60] sm:$0xf]
    %v157 = vld [vmem:[#allocation2 + $0x64] sm:$0xf]
    %v158 = vld [vmem:[#allocation2 + $0x68] sm:$0xf]
    %v159 = vld [vmem:[#allocation2 + $0x6c] sm:$0xf]
    %v160 = vld [vmem:[#allocation2 + $0x70] sm:$0xf]
    %v161 = vld [vmem:[#allocation2 + $0x74] sm:$0xf]
    %v162 = vld [vmem:[#allocation2 + $0x78] sm:$0xf]
    %v163 = vld [vmem:[#allocation2 + $0x7c] sm:$0xf]
    %v164 = vld [vmem:[%s4] sm:$0x1]
    %v166 = vperm.slane %v164, 0
    %v200 = vunpack.c.l.b16 %v132
    %v201 = vunpack.c.l.b16 %v133
    %v202 = vunpack.c.l.b16 %v134
    %v203 = vunpack.c.l.b16 %v135
    %v204 = vunpack.c.l.b16 %v136
    %v205 = vunpack.c.l.b16 %v137
    %v206 = vunpack.c.l.b16 %v138
    %v207 = vunpack.c.l.b16 %v139
    %v208 = vunpack.c.l.b16 %v140
    %v209 = vunpack.c.l.b16 %v141
    %v210 = vunpack.c.l.b16 %v142
    %v211 = vunpack.c.l.b16 %v143
    %v212 = vunpack.c.l.b16 %v144
    %v213 = vunpack.c.l.b16 %v145
    %v214 = vunpack.c.l.b16 %v146
    %v215 = vunpack.c.l.b16 %v147
    %v216 = vunpack.c.l.b16 %v148
    %v217 = vunpack.c.l.b16 %v149
    %v218 = vunpack.c.l.b16 %v150
    %v219 = vunpack.c.l.b16 %v151
    %v220 = vunpack.c.l.b16 %v152
    %v221 = vunpack.c.l.b16 %v153
    %v222 = vunpack.c.l.b16 %v154
    %v223 = vunpack.c.l.b16 %v155
    %v224 = vunpack.c.l.b16 %v156
    %v225 = vunpack.c.l.b16 %v157
    %v226 = vunpack.c.l.b16 %v158
    %v227 = vunpack.c.l.b16 %v159
    %v228 = vunpack.c.l.b16 %v160
    %v229 = vunpack.c.l.b16 %v161
    %v230 = vunpack.c.l.b16 %v162
    %v231 = vunpack.c.l.b16 %v163
    %v232 = vpack.c.b16 %v201, %v200
    %v233 = vpack.c.b16 %v203, %v202
    %v234 = vpack.c.b16 %v205, %v204
    %v235 = vpack.c.b16 %v207, %v206
    %v236 = vpack.c.b16 %v209, %v208
    %v237 = vpack.c.b16 %v211, %v210
    %v238 = vpack.c.b16 %v213, %v212
    %v239 = vpack.c.b16 %v215, %v214
    %v240 = vpack.c.b16 %v217, %v216
    %v241 = vpack.c.b16 %v219, %v218
    %v242 = vpack.c.b16 %v221, %v220
    %v243 = vpack.c.b16 %v223, %v222
    %v244 = vpack.c.b16 %v225, %v224
    %v245 = vpack.c.b16 %v227, %v226
    %v246 = vpack.c.b16 %v229, %v228
    %v247 = vpack.c.b16 %v231, %v230
    %264 = vmatpush.bf16.msra.mxu0 %v239
    %265 = vmatpush.bf16.msra.mxu0 %v238
    %266 = vmatpush.bf16.msra.mxu0 %v237
    %267 = vmatpush.bf16.msra.mxu0 %v236
    %268 = vmatpush.bf16.msra.mxu0 %v235
    %269 = vmatpush.bf16.msra.mxu0 %v234
    %270 = vmatpush.bf16.msra.mxu0 %v233
    %271 = vmatpush.bf16.msra.mxu0 %v232
    %272 = vmatmul.bf16.gmra.mxu0 %v130
    %v273 = vpop.f32.mrf.mxu0
    %v274 = vadd.f32 %v166, %v273
    %v275 = vpop.f32.mrf.mxu0
    %v276 = vadd.f32 %v166, %v275
    %277 = vdwg.mxu0
    %278 = vmatpush.bf16.msra.mxu0 %v247
    %279 = vmatpush.bf16.msra.mxu0 %v246
    %280 = vmatpush.bf16.msra.mxu0 %v245
    %281 = vmatpush.bf16.msra.mxu0 %v244
    %282 = vmatpush.bf16.msra.mxu0 %v243
    %283 = vmatpush.bf16.msra.mxu0 %v242
    %284 = vmatpush.bf16.msra.mxu0 %v241
    %285 = vmatpush.bf16.msra.mxu0 %v240
    %286 = vmatmul.bf16.gmra.mxu0 %v131
    %v287 = vpop.f32.mrf.mxu0
    %v288 = vadd.f32 %v274, %v287
    %v289 = vpop.f32.mrf.mxu0
    %v290 = vadd.f32 %v276, %v289
    %291 = vdwg.mxu0
    %vm292 = vcmp.gt.f32.partialorder %v288, 0.0
    %vm293 = vcmp.gt.f32.partialorder %v290, 0.0
    %v294 = vmul.f32 %v288, 0.15
    %v295 = vmul.f32 %v290, 0.15
    %v296 = vsel %vm292, %v288, %v294
    %v297 = vsel %vm293, %v290, %v295
    %v298 = vpack.c.bf16 %v297, %v296
    %v299 = vld [vmem:[%s5] sm:$0xf]
    %v300 = vld [vmem:[%s5 + $0x4] sm:$0xf]
    %v301 = vld [vmem:[%s5 + $0x8] sm:$0xf]
    %v302 = vld [vmem:[%s5 + $0xc] sm:$0xf]
    %v303 = vld [vmem:[%s5 + $0x10] sm:$0xf]
    %v304 = vld [vmem:[%s5 + $0x14] sm:$0xf]
    %v305 = vld [vmem:[%s5 + $0x18] sm:$0xf]
    %v306 = vld [vmem:[%s5 + $0x1c] sm:$0xf]
    %v307 = vld [vmem:[%s5 + $0x20] sm:$0xf]
    %v308 = vld [vmem:[%s5 + $0x24] sm:$0xf]
    %v309 = vld [vmem:[%s5 + $0x28] sm:$0xf]
    %v310 = vld [vmem:[%s5 + $0x2c] sm:$0xf]
    %v311 = vld [vmem:[%s5 + $0x30] sm:$0xf]
    %v312 = vld [vmem:[%s5 + $0x34] sm:$0xf]
    %v313 = vld [vmem:[%s5 + $0x38] sm:$0xf]
    %v314 = vld [vmem:[%s5 + $0x3c] sm:$0xf]
    %v315 = vld [vmem:[%s6] sm:$0x1]
    %v317 = vperm.slane %v315, 0
    %v335 = vunpack.c.l.b16 %v299
    %v336 = vunpack.c.l.b16 %v300
    %v337 = vunpack.c.l.b16 %v301
    %v338 = vunpack.c.l.b16 %v302
    %v339 = vunpack.c.l.b16 %v303
    %v340 = vunpack.c.l.b16 %v304
    %v341 = vunpack.c.l.b16 %v305
    %v342 = vunpack.c.l.b16 %v306
    %v343 = vunpack.c.l.b16 %v307
    %v344 = vunpack.c.l.b16 %v308
    %v345 = vunpack.c.l.b16 %v309
    %v346 = vunpack.c.l.b16 %v310
    %v347 = vunpack.c.l.b16 %v311
    %v348 = vunpack.c.l.b16 %v312
    %v349 = vunpack.c.l.b16 %v313
    %v350 = vunpack.c.l.b16 %v314
    %v351 = vpack.c.b16 %v336, %v335
    %v352 = vpack.c.b16 %v338, %v337
    %v353 = vpack.c.b16 %v340, %v339
    %v354 = vpack.c.b16 %v342, %v341
    %v355 = vpack.c.b16 %v344, %v343
    %v356 = vpack.c.b16 %v346, %v345
    %v357 = vpack.c.b16 %v348, %v347
    %v358 = vpack.c.b16 %v350, %v349
    %367 = vmatpush.bf16.msra.mxu0 %v358
    %368 = vmatpush.bf16.msra.mxu0 %v357
    %369 = vmatpush.bf16.msra.mxu0 %v356
    %370 = vmatpush.bf16.msra.mxu0 %v355
    %371 = vmatpush.bf16.msra.mxu0 %v354
    %372 = vmatpush.bf16.msra.mxu0 %v353
    %373 = vmatpush.bf16.msra.mxu0 %v352
    %374 = vmatpush.bf16.msra.mxu0 %v351
    %375 = vmatmul.bf16.gmra.mxu0 %v298
    %v376 = vpop.f32.mrf.mxu0
    %v377 = vadd.f32 %v317, %v376
    %v378 = vpop.f32.mrf.mxu0
    %v379 = vadd.f32 %v317, %v378
    %380 = vdwg.mxu0
    %vm381 = vcmp.gt.f32.partialorder %v377, 0.0
    %vm382 = vcmp.gt.f32.partialorder %v379, 0.0
    %v383 = vmul.f32 %v377, 0.15
    %v384 = vmul.f32 %v379, 0.15
    %v385 = vsel %vm381, %v377, %v383
    %v386 = vsel %vm382, %v379, %v384
    %v387 = vpack.c.bf16 %v386, %v385
    %v388 = vld [vmem:[%s7] sm:$0xf]
    %v389 = vld [vmem:[%s7 + $0x4] sm:$0xf]
    %v390 = vld [vmem:[%s7 + $0x8] sm:$0xf]
    %v391 = vld [vmem:[%s7 + $0xc] sm:$0xf]
    %v392 = vld [vmem:[%s8] sm:$0x1]
    %v394 = vperm.slane %v392, 0
    %v400 = vunpack.c.l.b16 %v388
    %v401 = vunpack.c.l.b16 %v389
    %v402 = vunpack.c.l.b16 %v390
    %v403 = vunpack.c.l.b16 %v391
    %v404 = vpack.c.b16 %v401, %v400
    %v405 = vpack.c.b16 %v403, %v402
    %v409 = vsel %vm86, %v387, 0
    %411 = vmatpush.bf16.msra.mxu0 0
    %412 = vmatpush.bf16.msra.mxu0 0
    %413 = vmatpush.bf16.msra.mxu0 0
    %414 = vmatpush.bf16.msra.mxu0 0
    %415 = vmatpush.bf16.msra.mxu0 0
    %416 = vmatpush.bf16.msra.mxu0 0
    %417 = vmatpush.bf16.msra.mxu0 %v405
    %418 = vmatpush.bf16.msra.mxu0 %v404
    %419 = vmatmul.bf16.gmra.mxu0 %v409
    %v420 = vpop.f32.mrf.mxu0
    %v421 = vadd.f32 %v394, %v420
    %v422 = vpop.f32.mrf.mxu0
    %v423 = vadd.f32 %v394, %v422
    %424 = vdwg.mxu0
    %vm425 = vcmp.gt.f32.partialorder %v421, 0.0
    %vm426 = vcmp.gt.f32.partialorder %v423, 0.0
    %v427 = vmul.f32 %v421, 0.15
    %v428 = vmul.f32 %v423, 0.15
    %v429 = vsel %vm425, %v421, %v427
    %v430 = vsel %vm426, %v423, %v428
    %vm431 = vcmask 15360
    %432 = vst.msk [vmem:[%s9] sm:$0xff] %vm431, %v429
    %433 = vst.msk [vmem:[%s9 + $0x8] sm:$0xff] %vm431, %v430
    // Predicated region
    $region42: #{tpu_custom_call.1} parent=1 // pred_check
      _
    $region43: #{tpu_custom_call.1} parent=1 // pred_check_branch
      %435 = sbr.rel (0) target = $region45
    $region44: #{tpu_custom_call.1} parent=1 // pred_region
      _
    $region45: #{tpu_custom_call.1} parent=1 // pred_fallthru
      _
    // Predicated region
    $region46: #{tpu_custom_call.1} parent=1 // pred_check
      _
    $region47: #{tpu_custom_call.1} parent=1 // pred_check_branch
      %437 = sbr.rel (0) target = $region49
    $region48: #{tpu_custom_call.1} parent=1 // pred_region
      _
    $region49: #{tpu_custom_call.1} parent=1 // pred_fallthru
      _
    %438 = vsyncpa [#allocation3], 1

</llo_original>
